<compile_context>
chip_gen: v6e
topology: v6e:2x2x1
jax: 0.10.0
libtpu: 0.0.40
codegen_flags: <defaults>
</compile_context>

<pallas_src>
import functools

import jax
import jax.numpy as jnp
from jax import lax
from jax.experimental import pallas as pl
from jax.experimental.pallas import tpu as pltpu

EPS = 1e-09
TEMP = 0.66  # digit_temp (unused in the deterministic decode path)

_VMEM_LIMIT = 32 * 1024 * 1024  # safe scoped-VMEM budget on v5e / v6e / v7x


def _round_up(x, m):
    return ((x + m - 1) // m) * m


# ----------------------------------------------------------------------------
# Pallas kernels
# ----------------------------------------------------------------------------
def _mm_bias_act_kernel(a_ref, b_ref, bias_ref, o_ref, *, act):
    y = jnp.dot(a_ref[...], b_ref[...], preferred_element_type=jnp.float32)
    y = y + bias_ref[...]
    if act == "relu":
        y = jnp.maximum(y, 0.0)
    elif act == "sigmoid":
        y = jax.nn.sigmoid(y)
    o_ref[...] = y.astype(o_ref.dtype)


def _conv_mm_kernel(a_ref, b_ref, bias_ref, o_ref, *, act):
    # a_ref: (1, tm, K) bf16, b_ref: (1, K, Np) bf16, bias_ref: (1, Np) f32
    y = jnp.dot(a_ref[0], b_ref[0], preferred_element_type=jnp.float32)
    y = y + bias_ref[...]
    if act == "relu":
        y = jnp.maximum(y, 0.0)
    elif act == "sigmoid":
        y = jax.nn.sigmoid(y)
    o_ref[0] = y.astype(o_ref.dtype)


def _bce_kernel(xhat_ref, x_ref, o_ref):
    @pl.when(pl.program_id(0) == 0)
    def _():
        o_ref[...] = jnp.zeros_like(o_ref)

    xh = xhat_ref[...]
    x = x_ref[...]
    ll = jnp.log(xh + EPS) * x + jnp.log(1.0 - xh + EPS) * (1.0 - x)
    o_ref[...] += -jnp.sum(ll, axis=-1, keepdims=True)


# ----------------------------------------------------------------------------
# Linear (dec_hidden) as a single fused matmul+bias+ReLU
# ----------------------------------------------------------------------------
def linear_bias_act(a, w, bias_row, act="relu", out_dtype=jnp.float32):
    """act(a @ w + bias). a: (M,K), w: (K,N) bf16, bias_row: (1,N) f32. N % 128 == 0."""
    M, K = a.shape
    K2, N = w.shape
    assert K == K2 and N % 128 == 0
    Mp = _round_up(M, 8)
    Kp = _round_up(K, 128)
    a = a.astype(jnp.bfloat16)
    if Mp != M or Kp != K:
        a = jnp.pad(a, ((0, Mp - M), (0, Kp - K)))
    if Kp != K:
        w = jnp.pad(w, ((0, Kp - K), (0, 0)))
    out = pl.pallas_call(
        functools.partial(_mm_bias_act_kernel, act=act),
        out_shape=jax.ShapeDtypeStruct((Mp, N), out_dtype),
        grid=(1,),
        in_specs=[
            pl.BlockSpec((Mp, Kp), lambda i: (0, 0)),
            pl.BlockSpec((Kp, N), lambda i: (0, 0)),
            pl.BlockSpec((1, N), lambda i: (0, 0)),
        ],
        out_specs=pl.BlockSpec((Mp, N), lambda i: (0, 0)),
        compiler_params=pltpu.CompilerParams(
            dimension_semantics=("parallel",),
            vmem_limit_bytes=_VMEM_LIMIT,
        ),
    )(a, w, bias_row)
    return out[:M]


# ----------------------------------------------------------------------------
# ConvTranspose2d(k=4, s=2, p=1): parity decomposition, all 4 parities in one call
# ----------------------------------------------------------------------------
# For output row oh = 2a + ph, the contributing (window offset dh, kernel row kh):
#   ph=0: (dh=0 -> kh=3), (dh=1 -> kh=1);  ph=1: (dh=0 -> kh=2), (dh=1 -> kh=0)
_K_MAP = ((3, 1), (2, 0))


def _prep_conv_weights(w, b):
    """w: (Cin,Cout,4,4) [torch ConvTranspose2d layout], b: (Cout,).
    Returns (wstack (4, 4*Cin, Np) bf16, bias_row (1, Np) f32); row = tap*Cin + cin."""
    cin, cout = w.shape[0], w.shape[1]
    npad = _round_up(cout, 128)
    mats = []
    for ph in (0, 1):
        for pw in (0, 1):
            kh, kw = _K_MAP[ph], _K_MAP[pw]
            mats.append(jnp.concatenate(
                [w[:, :, kh[0], kw[0]],
                 w[:, :, kh[0], kw[1]],
                 w[:, :, kh[1], kw[0]],
                 w[:, :, kh[1], kw[1]]], axis=0))  # (4*Cin, Cout)
    wstack = jnp.stack(mats, axis=0)  # (4, 4*Cin, Cout), parity = ph*2 + pw
    wstack = jnp.pad(wstack, ((0, 0), (0, 0), (0, npad - cout))).astype(jnp.bfloat16)
    bias_row = jnp.pad(b.astype(jnp.float32), (0, npad - cout)).reshape(1, npad)
    return wstack, bias_row


def _make_patches(x_nhwc):
    """x: (N,H,W,C) -> (4, N*H*W, 4*C) bf16; tap = dh*2+dw, column = tap*C + c
    (contiguous lane concatenation, no per-channel interleave)."""
    n, h, w, c = x_nhwc.shape
    xb = x_nhwc.astype(jnp.bfloat16)
    xp = jnp.pad(xb, ((0, 0), (1, 1), (1, 1), (0, 0)))
    parities = []
    for ph in (0, 1):
        for pw in (0, 1):
            win = xp[:, ph:ph + h + 1, pw:pw + w + 1, :]
            taps = jnp.concatenate(
                [win[:, 0:h, 0:w, :],
                 win[:, 0:h, 1:w + 1, :],
                 win[:, 1:h + 1, 0:w, :],
                 win[:, 1:h + 1, 1:w + 1, :]], axis=-1)  # (N,H,W,4C)
            parities.append(taps.reshape(n * h * w, 4 * c))
    return jnp.stack(parities, axis=0)


def conv_transpose_4x4_s2_p1(x_nhwc, wstack, bias_row, cout, act, out_dtype=jnp.float32):
    """Fused 4-parity ConvTranspose2d(k=4,s=2,p=1): (N,H,W,Cin) -> (N,2H,2W,cout)."""
    n, h, w, cin = x_nhwc.shape
    k = 4 * cin
    npad = wstack.shape[-1]
    m = n * h * w

    patches = _make_patches(x_nhwc)  # (4, m, k) bf16
    kp = _round_up(k, 128)
    if m >= 1024:
        tm = 1024
        mp = _round_up(m, tm)
    else:
        mp = _round_up(m, 8)
        tm = mp
    if mp != m or kp != k:  # never triggered in this network (K mult. of 128, M mult. of 8)
        patches = jnp.pad(patches, ((0, 0), (0, mp - m), (0, kp - k)))
    ws = wstack
    if kp != k:
        ws = jnp.pad(ws, ((0, 0), (0, kp - k), (0, 0)))

    y = pl.pallas_call(
        functools.partial(_conv_mm_kernel, act=act),
        out_shape=jax.ShapeDtypeStruct((4, mp, npad), out_dtype),
        grid=(4, mp // tm),
        in_specs=[
            pl.BlockSpec((1, tm, kp), lambda p, i: (p, i, 0)),
            pl.BlockSpec((1, kp, npad), lambda p, i: (p, 0, 0)),
            pl.BlockSpec((1, npad), lambda p, i: (0, 0)),
        ],
        out_specs=pl.BlockSpec((1, tm, npad), lambda p, i: (p, i, 0)),
        compiler_params=pltpu.CompilerParams(
            dimension_semantics=("parallel", "parallel"),
            vmem_limit_bytes=_VMEM_LIMIT,
        ),
    )(patches, ws, bias_row)

    # (4, mp, npad) -> (N, 2H, 2W, cout): output[n, 2a+ph, 2b+pw, :] = y[ph*2+pw, n*H*W+a*W+b, :]
    y = y[:, :m, :cout].reshape(2, 2, n, h, w, cout)
    y = jnp.transpose(y, (2, 3, 0, 4, 1, 5))  # (N, H, 2, W, 2, cout)
    return y.reshape(n, 2 * h, 2 * w, cout)


# ----------------------------------------------------------------------------
# Tiled Bernoulli reconstruction loss
# ----------------------------------------------------------------------------
def _choose_dblk(d, target=8192):
    if d % 128 != 0:
        return d
    kmax = max(1, min(d, target) // 128)
    for kk in range(kmax, 0, -1):
        if d % (kk * 128) == 0:
            return kk * 128
    return d


def bce_loss(xhat_flat, x_flat):
    """-(log(xhat+EPS)*x + log(1-xhat+EPS)*(1-x)).sum(-1), per row."""
    b, d = x_flat.shape
    dblk = _choose_dblk(d)
    out = pl.pallas_call(
        _bce_kernel,
        out_shape=jax.ShapeDtypeStruct((b, 1), jnp.float32),
        grid=(d // dblk,),
        in_specs=[
            pl.BlockSpec((b, dblk), lambda i: (0, i)),
            pl.BlockSpec((b, dblk), lambda i: (0, i)),
        ],
        out_specs=pl.BlockSpec((b, 1), lambda i: (0, 0)),
        compiler_params=pltpu.CompilerParams(
            dimension_semantics=("arbitrary",),
            vmem_limit_bytes=_VMEM_LIMIT,
        ),
    )(xhat_flat.astype(jnp.float32), x_flat.astype(jnp.float32))
    return out[:, 0]


# ----------------------------------------------------------------------------
# DecoderImg parameters + forward
# ----------------------------------------------------------------------------
_CONV_DIMS = [(512, 256), (256, 128), (128, 64), (64, 64), (64, 32), (32, 3)]
_ACTS = ["relu"] * 5 + ["sigmoid"]


def init_params(key, z_private_dim, z_shared_dim):
    """Deterministic (He-normal) initialization matching the module's shapes."""
    params = {}
    in_dim = z_private_dim + z_shared_dim
    key, sub = jax.random.split(key)
    params["lin_w"] = jax.random.normal(sub, (2048, in_dim), jnp.float32) * jnp.sqrt(2.0 / in_dim)
    params["lin_b"] = jnp.zeros((2048,), jnp.float32)
    conv = []
    for ci, co in _CONV_DIMS:
        key, sub = jax.random.split(key)
        w = jax.random.normal(sub, (ci, co, 4, 4), jnp.float32) * jnp.sqrt(2.0 / (ci * 16))
        conv.append((w, jnp.zeros((co,), jnp.float32)))
    params["conv"] = conv
    return params


def prepare_params(params):
    """One-time weight re-layout: transposed bf16 linear weight, per-parity conv mats."""
    return {
        "lin_w_t": params["lin_w"].T.astype(jnp.bfloat16),               # (in_dim, 2048)
        "lin_b": params["lin_b"].astype(jnp.float32).reshape(1, -1),      # (1, 2048)
        "conv": [_prep_conv_weights(w, b) for (w, b) in params["conv"]],
    }


@jax.jit
def decoder_img_forward(prep, images, z_private, z_shared):
    # TODO(synk): probtorch Trace / p.normal node registration (prior log-prob &
    # KL bookkeeping) has no Pallas equivalent; only the deterministic decode and
    # the registered Bernoulli reconstruction loss term are implemented here.
    n = z_private.shape[0]
    latents = jnp.concatenate([z_private, z_shared], axis=-1)
    hiddens = linear_bias_act(latents, prep["lin_w_t"], prep["lin_b"],
                              act="relu", out_dtype=jnp.bfloat16)        # (N, 2048)
    x = hiddens.reshape(n, 512, 2, 2)            # torch .view(-1, 512, 2, 2) semantics
    x = jnp.transpose(x, (0, 2, 3, 1))           # NHWC (N, 2, 2, 512)
    for li, ((wstack, bias_row), (_, cout)) in enumerate(zip(prep["conv"], _CONV_DIMS)):
        last = li == len(_CONV_DIMS) - 1
        x = conv_transpose_4x4_s2_p1(
            x, wstack, bias_row, cout, _ACTS[li],
            out_dtype=jnp.float32 if last else jnp.bfloat16)
    images_mean_nhwc = x                         # (N, 128, 128, 3), f32
    images_nhwc = jnp.transpose(images, (0, 2, 3, 1))
    loss = bce_loss(images_mean_nhwc.reshape(n, -1), images_nhwc.reshape(n, -1))
    images_mean = jnp.transpose(images_mean_nhwc, (0, 3, 1, 2))  # NCHW, torch convention
    return images_mean, loss


# ----------------------------------------------------------------------------
# Dense reference for the parity decomposition (PyTorch ConvTranspose2d semantics)
# ----------------------------------------------------------------------------
def _ref_conv_transpose_nchw(x, w, b):
    """x: (N,Cin,H,W), w: (Cin,Cout,4,4), b: (Cout,). k=4, s=2, p=1."""
    w_conv = jnp.transpose(jnp.flip(w, axis=(2, 3)), (1, 0, 2, 3))  # (Cout,Cin,4,4)
    out = lax.conv_general_dilated(
        x, w_conv, window_strides=(1, 1), padding=((2, 2), (2, 2)),
        lhs_dilation=(2, 2), dimension_numbers=("NCHW", "OIHW", "NCHW"),
        precision=lax.Precision.HIGHEST)
    return out + b[None, :, None, None]


if __name__ == "__main__":
    key = jax.random.PRNGKey(0)
    kp, kimg, kzp, kzs, kw, kb, kx = jax.random.split(key, 7)

    # --- tiny numerical check of the fused 4-parity conv-transpose kernel ------
    cin_t, cout_t, hh = 32, 16, 4
    wt = jax.random.normal(kw, (cin_t, cout_t, 4, 4), jnp.float32) * 0.1
    bt = jax.random.normal(kb, (cout_t,), jnp.float32) * 0.1
    xt = jax.random.normal(kx, (2, hh, hh, cin_t), jnp.float32)
    ws_t, br_t = _prep_conv_weights(wt, bt)
    got = conv_transpose_4x4_s2_p1(xt, ws_t, br_t, cout_t, act="none",
                                   out_dtype=jnp.float32)
    ref = jnp.transpose(
        _ref_conv_transpose_nchw(jnp.transpose(xt, (0, 3, 1, 2)), wt, bt), (0, 2, 3, 1))
    err = float(jnp.max(jnp.abs(got - ref)))
    tol = 0.03 * (1.0 + float(jnp.max(jnp.abs(ref))))  # bf16-operand tolerance
    assert err < tol, (err, tol)

    # --- full DecoderImg forward ------------------------------------------------
    batch = 2
    z_private_dim = 16
    z_shared_dim = 16
    num_hidden = 256  # accepted by __init__ but unused in the forward path

    params = init_params(kp, z_private_dim, z_shared_dim)
    prep = prepare_params(params)
    images = jax.random.uniform(kimg, (batch, 3, 128, 128), jnp.float32)
    z_private = jax.random.normal(kzp, (batch, z_private_dim), jnp.float32)
    z_shared = jax.random.normal(kzs, (batch, z_shared_dim), jnp.float32)

    images_mean, loss = decoder_img_forward(prep, images, z_private, z_shared)
    jax.block_until_ready((images_mean, loss))

    assert images_mean.shape == (batch, 3, 128, 128)
    assert loss.shape == (batch,)
    assert bool(jnp.all(jnp.isfinite(images_mean))) and bool(jnp.all(jnp.isfinite(loss)))
    print("KERNEL_OK")
</pallas_src>

<mosaic_0001>
module attributes {stable_mosaic.version = 11 : i64} {
  func.func @_conv_mm_kernel(%arg0: i32, %arg1: i32, %arg2: memref<1x32x128xbf16, #tpu.memory_space<vmem>>, %arg3: memref<1x128x128xbf16, #tpu.memory_space<vmem>>, %arg4: memref<1x128xf32, #tpu.memory_space<vmem>>, %arg5: memref<1x32x128xf32, #tpu.memory_space<vmem>>) attributes {dimension_semantics = [#tpu.dimension_semantics<parallel>, #tpu.dimension_semantics<parallel>], iteration_bounds = array<i64: 4, 1>, scalar_prefetch = 0 : i64, scratch_operands = 0 : i64, tpu.core_type = #tpu.core_type<tc>, window_params = [{transform_indices = @transform_0, window_bounds = array<i64: 1, 32, 128>}, {transform_indices = @transform_1, window_bounds = array<i64: 1, 128, 128>}, {pipeline_mode = #tpu.pipeline_mode<synchronous>, transform_indices = @transform_2, window_bounds = array<i64: 1, 128>}, {transform_indices = @transform_3, window_bounds = array<i64: 1, 32, 128>}]} {
    %c0 = arith.constant 0 : index
    %c0_0 = arith.constant 0 : index
    %c0_1 = arith.constant 0 : index
    %0 = vector.load %arg2[%c0, %c0_0, %c0_1] : memref<1x32x128xbf16, #tpu.memory_space<vmem>>, vector<1x32x128xbf16>
    %1 = vector.shape_cast %0 : vector<1x32x128xbf16> to vector<32x128xbf16>
    %c0_2 = arith.constant 0 : index
    %c0_3 = arith.constant 0 : index
    %c0_4 = arith.constant 0 : index
    %2 = vector.load %arg3[%c0_2, %c0_3, %c0_4] : memref<1x128x128xbf16, #tpu.memory_space<vmem>>, vector<1x128x128xbf16>
    %3 = vector.shape_cast %2 : vector<1x128x128xbf16> to vector<128x128xbf16>
    %cst = arith.constant dense<0.000000e+00> : vector<32x128xf32>
    %4 = tpu.matmul %1, %3, %cst {dimension_numbers = #tpu.dot_dimension_numbers<[1], [0], [0], [1], [0, 0, 1, 1], [], []>} : vector<32x128xbf16>, vector<128x128xbf16>, vector<32x128xf32> -> vector<32x128xf32>
    %c0_5 = arith.constant 0 : index
    %c0_6 = arith.constant 0 : index
    %5 = vector.load %arg4[%c0_5, %c0_6] : memref<1x128xf32, #tpu.memory_space<vmem>>, vector<1x128xf32>
    %6 = vector.broadcast %5 : vector<1x128xf32> to vector<32x128xf32>
    %7 = arith.addf %4, %6 : vector<32x128xf32>
    %c0_7 = arith.constant 0 : index
    %c0_8 = arith.constant 0 : index
    %c0_9 = arith.constant 0 : index
    %8 = vector.load %arg5[%c0_7, %c0_8, %c0_9] : memref<1x32x128xf32, #tpu.memory_space<vmem>>, vector<1x32x128xf32>
    %9 = vector.shape_cast %8 : vector<1x32x128xf32> to vector<32x128xf32>
    %10 = vector.shape_cast %7 : vector<32x128xf32> to vector<1x32x128xf32>
    tpu.vector_store %arg5[%c0_7, %c0_8, %c0_9], %10 {strides = array<i32>} : memref<1x32x128xf32, #tpu.memory_space<vmem>>, vector<1x32x128xf32>,
    return
  }
  func.func @transform_0(%arg0: i32, %arg1: i32) -> (i32, i32, i32) {
    %c0_i32 = arith.constant 0 : i32
    %c0_i32_0 = arith.constant 0 : i32
    return %arg0, %arg1, %c0_i32 : i32, i32, i32
  }
  func.func @transform_1(%arg0: i32, %arg1: i32) -> (i32, i32, i32) {
    %c0_i32 = arith.constant 0 : i32
    %c0_i32_0 = arith.constant 0 : i32
    %c0_i32_1 = arith.constant 0 : i32
    return %arg0, %c0_i32, %c0_i32_0 : i32, i32, i32
  }
  func.func @transform_2(%arg0: i32, %arg1: i32) -> (i32, i32) {
    %c0_i32 = arith.constant 0 : i32
    %c0_i32_0 = arith.constant 0 : i32
    %c0_i32_1 = arith.constant 0 : i32
    return %c0_i32, %c0_i32_0 : i32, i32
  }
  func.func @transform_3(%arg0: i32, %arg1: i32) -> (i32, i32, i32) {
    %c0_i32 = arith.constant 0 : i32
    %c0_i32_0 = arith.constant 0 : i32
    return %arg0, %arg1, %c0_i32 : i32, i32, i32
  }
}

</mosaic_0001>

<llo_original>
// kernel: tpu_custom_call.1
$region0: #{tpu_custom_call.1}
  #allocation0 [shape = 'u32[]', space=smem, size = 0x4, offset = 0x4, fixed_abs, tag = 'smem constant byte address 0x4 - core index']
  #allocation1 [shape = 'u32[144,128]{1,0:T(1,128)}', space=vmem, size = 0x12000, scoped, tag = 'internal scratch']
  %s0 = inlined_call_operand.hbm [shape: bf16[4,32,128], index: 0, kind: input, shape index: {}]
  %s1 = inlined_call_operand.hbm [shape: bf16[4,128,128], index: 1, kind: input, shape index: {}]
  %s2 = inlined_call_operand.vmem [shape: f32[1,128], index: 2, kind: input, shape index: {}]
  %s3 = inlined_call_operand.hbm [shape: f32[4,32,128], index: 3, kind: output, shape index: {}]
  %s4 = sld [smem:[#allocation0]]
  $region53: #{tpu_custom_call.1} parent=0
    _
  %s6 = ssub.s32 1, %s4
  %s7 = scalar_select 0, %s6, %s4
  $region1: #{tpu_custom_call.1} parent=0
    #allocation2 [shape = 'u8[16384]{0}', space=vmem, size = 0x4000, scoped, tag = 'input window, operand 0']
    #allocation3 [shape = 's32[2]{0}', space=sflag, size = 0x8, scoped, tag = 'scoped memory for tpu_custom_call.1']
    #allocation4 [shape = 's32[2]{0}', space=sflag, size = 0x8, scoped, tag = 'scoped memory for tpu_custom_call.1']
    #allocation5 [shape = 'u8[65536]{0}', space=vmem, size = 0x10000, scoped, tag = 'input window, operand 1']
    #allocation6 [shape = 's32[2]{0}', space=sflag, size = 0x8, scoped, tag = 'scoped memory for tpu_custom_call.1']
    #allocation7 [shape = 'u8[32768]{0}', space=vmem, size = 0x8000, scoped, tag = 'output window, operand 0']
    %8 = vsyncpa [#allocation3], 0
    %s9 = scalar_lea.sflag [#allocation3], 1
    %10 = vsyncpa %s9, 0
    %11 = vsyncpa [#allocation6], 0
    %s12 = scalar_lea.sflag [#allocation6], 1
    %13 = vsyncpa %s12, 0
    %14 = vsyncpa [#allocation4], 0
    %s15 = scalar_lea.sflag [#allocation4], 1
    %16 = vsyncpa %s15, 0
    loop: start=0, step=1, limit=6
    $region2: #{tpu_custom_call.1} parent=1 // loop_pre_header
      _
    $region3: #{tpu_custom_call.1} parent=1 // loop_header
      %s18 = sphi 0, %s22
      %p19 = scmp.ge.s32.totalorder %s18, 6
      %s25 = sphi 0, %s37
      %s26 = sphi 0, %s33
      %s27 = sphi 0, %s25
      %s28 = sphi 0, %s26
      %s29 = sphi 0, %s27
      %s30 = sphi 0, %s28
      %s42 = sphi 0, %s44
      %s45 = sphi 0, %s42
      %s46 = sphi 0, %s45
      %s62 = sphi 0, %s46
      %s68 = sphi 0, %s70
      %s71 = sphi 0, %s68
      %s72 = sphi 0, %s71
      %s88 = sphi 0, %s72
      %s92 = sphi 0, %s92
      %s94 = sphi 0, %s92
      %s95 = sphi 0, %s94
      %s109 = sphi 0, %s95
      %s117 = sphi 0, %s119
      %s120 = sphi 0, %s117
      %s121 = sphi 0, %s120
      %s137 = sphi 0, %s121
    $region4: #{tpu_custom_call.1} parent=1 // loop_header_branch
      %21 = sbr.rel (%p19) target = $region8
    $region5: #{tpu_custom_call.1} parent=1 // loop_body
      %s23 = ssub.s32 %s18, 1
      %s24 = ssub.s32 %s18, 2
      %s31 = sadd.s32 1, %s26
      %p32 = scmp.ge.s32.totalorder %s31, 1
      %s33 = scalar_select %p32, 0, %s31
      %s34 = sadd.s32 1, %s25
      %s35 = scalar_select %p32, %s34, %s25
      %p36 = scmp.ge.s32.totalorder %s35, 4
      %s37 = scalar_select %p36, 0, %s35
      %s38 = ssub.s32 %s25, %s37
      %s39 = ssub.s32 %s26, %s33
      %s40 = sor.u32 %s38, %s39
      %p41 = scmp.eq.s32.totalorder %s40, 0
      %s43 = sadd.s32 %s42, 1
      %s44 = scalar_select %p41, %s42, %s43
      %p47 = pneg %p41
      %p48 = scmp.eq.s32.totalorder %s18, 3
      %p49 = por %p47, %p48
      %p50 = scmp.ne.s32.totalorder %s42, %s45
      %p51 = scmp.eq.s32.totalorder %s18, 0
      %p52 = por %p50, %p51
      %p53 = scmp.ne.s32.totalorder %s42, %s45
      %p54 = scmp.eq.s32.totalorder %s23, 3
      %p55 = por %p53, %p54
      %p56 = scmp.ne.s32.totalorder %s45, %s46
      %p57 = scmp.eq.s32.totalorder %s23, 0
      %p58 = por %p56, %p57
      %p59 = scmp.ne.s32.totalorder %s45, %s46
      %p60 = scmp.eq.s32.totalorder %s24, 3
      %p61 = por %p59, %p60
      %p63 = scmp.ne.s32.totalorder %s46, %s62
      %p64 = scmp.eq.s32.totalorder %s24, 0
      %p65 = por %p63, %p64
      %s66 = ssub.s32 %s25, %s37
      %p67 = scmp.eq.s32.totalorder %s66, 0
      %s69 = sadd.s32 %s68, 1
      %s70 = scalar_select %p67, %s68, %s69
      %p73 = pneg %p67
      %p74 = scmp.eq.s32.totalorder %s18, 3
      %p75 = por %p73, %p74
      %p76 = scmp.ne.s32.totalorder %s68, %s71
      %p77 = scmp.eq.s32.totalorder %s18, 0
      %p78 = por %p76, %p77
      %p79 = scmp.ne.s32.totalorder %s68, %s71
      %p80 = scmp.eq.s32.totalorder %s23, 3
      %p81 = por %p79, %p80
      %p82 = scmp.ne.s32.totalorder %s71, %s72
      %p83 = scmp.eq.s32.totalorder %s23, 0
      %p84 = por %p82, %p83
      %p85 = scmp.ne.s32.totalorder %s71, %s72
      %p86 = scmp.eq.s32.totalorder %s24, 3
      %p87 = por %p85, %p86
      %p89 = scmp.ne.s32.totalorder %s72, %s88
      %p90 = scmp.eq.s32.totalorder %s24, 0
      %p91 = por %p89, %p90
      %s93 = sadd.s32 %s92, 1
      %p96 = scmp.eq.s32.totalorder %s18, 3
      %p97 = scmp.ne.s32.totalorder %s92, %s94
      %p98 = scmp.eq.s32.totalorder %s18, 0
      %p99 = por %p97, %p98
      %p100 = scmp.ne.s32.totalorder %s92, %s94
      %p101 = scmp.eq.s32.totalorder %s23, 3
      %p102 = por %p100, %p101
      %p103 = scmp.ne.s32.totalorder %s94, %s95
      %p104 = scmp.eq.s32.totalorder %s23, 0
      %p105 = por %p103, %p104
      %p106 = scmp.ne.s32.totalorder %s94, %s95
      %p107 = scmp.eq.s32.totalorder %s24, 3
      %p108 = por %p106, %p107
      %p110 = scmp.ne.s32.totalorder %s95, %s109
      %p111 = scmp.eq.s32.totalorder %s24, 0
      %p112 = por %p110, %p111
      %s113 = ssub.s32 %s25, %s37
      %s114 = ssub.s32 %s26, %s33
      %s115 = sor.u32 %s113, %s114
      %p116 = scmp.eq.s32.totalorder %s115, 0
      %s118 = sadd.s32 %s117, 1
      %s119 = scalar_select %p116, %s117, %s118
      %p122 = pneg %p116
      %p123 = scmp.eq.s32.totalorder %s18, 3
      %p124 = por %p122, %p123
      %p125 = scmp.ne.s32.totalorder %s117, %s120
      %p126 = scmp.eq.s32.totalorder %s18, 0
      %p127 = por %p125, %p126
      %p128 = scmp.ne.s32.totalorder %s117, %s120
      %p129 = scmp.eq.s32.totalorder %s23, 3
      %p130 = por %p128, %p129
      %p131 = scmp.ne.s32.totalorder %s120, %s121
      %p132 = scmp.eq.s32.totalorder %s23, 0
      %p133 = por %p131, %p132
      %p134 = scmp.ne.s32.totalorder %s120, %s121
      %p135 = scmp.eq.s32.totalorder %s24, 3
      %p136 = por %p134, %p135
      %p138 = scmp.ne.s32.totalorder %s121, %s137
      %p139 = scmp.eq.s32.totalorder %s24, 0
      %p140 = por %p138, %p139
      %p141 = scmp.le.s32.totalorder 1, %s18
      %p142 = scmp.lt.s32.totalorder %s18, 5
      %p143 = pnand %p141, %p142
      %p144 = pneg %p143
      // Predicated region
      $region9: #{tpu_custom_call.1} parent=5 // pred_check
        _
      $region10: #{tpu_custom_call.1} parent=5 // pred_check_branch
        %146 = sbr.rel (%p143) target = $region12
      $region11: #{tpu_custom_call.1} parent=5 // pred_region
        %s147 = ssub.s32 %s18, 1
        // Predicated region
        $region13: #{tpu_custom_call.1} parent=11 // pred_check
          %p148 = pneg %p105
        $region14: #{tpu_custom_call.1} parent=11 // pred_check_branch
          %150 = sbr.rel (%p148) target = $region16
        $region15: #{tpu_custom_call.1} parent=11 // pred_region
          _
        $region16: #{tpu_custom_call.1} parent=11 // pred_fallthru
          _
      $region12: #{tpu_custom_call.1} parent=5 // pred_fallthru
        _
      %p151 = scmp.lt.s32.totalorder %s18, 4
      // Predicated region
      $region17: #{tpu_custom_call.1} parent=5 // pred_check
        %p152 = pneg %p151
      $region18: #{tpu_custom_call.1} parent=5 // pred_check_branch
        %154 = sbr.rel (%p152) target = $region20
      $region19: #{tpu_custom_call.1} parent=5 // pred_region
        // Predicated region
        $region21: #{tpu_custom_call.1} parent=19 // pred_check
          %p155 = pneg %p52
        $region22: #{tpu_custom_call.1} parent=19 // pred_check_branch
          %157 = sbr.rel (%p155) target = $region24
        $region23: #{tpu_custom_call.1} parent=19 // pred_region
          %s158 = sand.u32 %s42, 1
          %s159 = scalar_lea.sflag [#allocation3], %s158
          %s160 = sand.u32 %s42, 1
          %s161 = smul.addr %s160, 16
          %s162 = scalar_lea.vmem [#allocation2], %s161
          %s163 = smul.u32 4, %s26
          %s165 = ssub.s32 256, 256
          %166 = vsyncadd %s159, %s165
          %s167 = smul.addr %s25, 4
          %s168 = sadd.s32 %s163, %s167
          %s169 = smul.addr %s168, 64
          %s170 = scalar_lea.hbm %s0, %s169
          %s171 = sshll.u32 %s162, 4
          %s172 = int_to_ptr.vmem [resolvable:$true] %s171
          %177 = dma.hbm_to_vmem [thread:$0]  %s170, 256, %s172, %s159, 64, 64, 4
        $region24: #{tpu_custom_call.1} parent=19 // pred_fallthru
          _
        // Predicated region
        $region25: #{tpu_custom_call.1} parent=19 // pred_check
          %p178 = pneg %p78
        $region26: #{tpu_custom_call.1} parent=19 // pred_check_branch
          %180 = sbr.rel (%p178) target = $region28
        $region27: #{tpu_custom_call.1} parent=19 // pred_region
          %s181 = sand.u32 %s68, 1
          %s182 = scalar_lea.sflag [#allocation6], %s181
          %s183 = sand.u32 %s68, 1
          %s184 = smul.addr %s183, 64
          %s185 = scalar_lea.vmem [#allocation5], %s184
          %s187 = ssub.s32 1024, 1024
          %188 = vsyncadd %s182, %s187
          %s189 = smul.addr %s25, 16
          %s190 = smul.addr %s189, 64
          %s191 = scalar_lea.hbm %s1, %s190
          %s192 = sshll.u32 %s185, 4
          %s193 = int_to_ptr.vmem [resolvable:$true] %s192
          %198 = dma.hbm_to_vmem [thread:$0]  %s191, 1024, %s193, %s182, 64, 64, 4
        $region28: #{tpu_custom_call.1} parent=19 // pred_fallthru
          _
      $region20: #{tpu_custom_call.1} parent=5 // pred_fallthru
        _
      %p199 = scmp.le.s32.totalorder 1, %s18
      %p200 = scmp.lt.s32.totalorder %s18, 5
      %p201 = pnand %p199, %p200
      %p202 = pneg %p201
      // Predicated region
      $region29: #{tpu_custom_call.1} parent=5 // pred_check
        _
      $region30: #{tpu_custom_call.1} parent=5 // pred_check_branch
        %204 = sbr.rel (%p201) target = $region32
      $region31: #{tpu_custom_call.1} parent=5 // pred_region
        %s205 = ssub.s32 %s18, 1
        %s206 = sand.u32 %s45, 1
        %s207 = scalar_lea.sflag [#allocation3], %s206
        %s208 = sand.u32 %s45, 1
        %s209 = smul.addr %s208, 16
        %s210 = scalar_lea.vmem [#allocation2], %s209
        // Predicated region
        $region33: #{tpu_custom_call.1} parent=31 // pred_check
          %p211 = pneg %p58
        $region34: #{tpu_custom_call.1} parent=31 // pred_check_branch
          %213 = sbr.rel (%p211) target = $region36
        $region35: #{tpu_custom_call.1} parent=31 // pred_region
          %214 = dma.done %s207, 256
        $region36: #{tpu_custom_call.1} parent=31 // pred_fallthru
          _
        %s215 = sand.u32 %s71, 1
        %s216 = scalar_lea.sflag [#allocation6], %s215
        %s217 = sand.u32 %s71, 1
        %s218 = smul.addr %s217, 64
        %s219 = scalar_lea.vmem [#allocation5], %s218
        // Predicated region
        $region37: #{tpu_custom_call.1} parent=31 // pred_check
          %p220 = pneg %p84
        $region38: #{tpu_custom_call.1} parent=31 // pred_check_branch
          %222 = sbr.rel (%p220) target = $region40
        $region39: #{tpu_custom_call.1} parent=31 // pred_region
          %223 = dma.done %s216, 1024
        $region40: #{tpu_custom_call.1} parent=31 // pred_fallthru
          _
        %s224 = sand.u32 %s45, 1
        %s225 = scalar_lea.sflag [#allocation3], %s224
        %s226 = sand.u32 %s45, 1
        %s227 = smul.addr %s226, 16
        %s228 = scalar_lea.vmem [#allocation2], %s227
        %p229 = pneg %p58
        %p230 = pneg %p55
        %s231 = sand.u32 %s71, 1
        %s232 = scalar_lea.sflag [#allocation6], %s231
        %s233 = sand.u32 %s71, 1
        %s234 = smul.addr %s233, 64
        %s235 = scalar_lea.vmem [#allocation5], %s234
        %p236 = pneg %p84
        %p237 = pneg %p81
        %p238 = pneg %p105
        %p239 = pneg %p102
        %p240 = pneg %p133
        %p241 = pneg %p130
        %s242 = sand.u32 %s120, 1
        %s243 = scalar_lea.sflag [#allocation4], %s242
        %s244 = sand.u32 %s120, 1
        %s245 = smul.addr %s244, 32
        %s246 = scalar_lea.vmem [#allocation7], %s245
        %s247 = smul.u32 4, %s28
        %s248 = smul.u32 4, %s28
        %v250 = vld [vmem:[%s210] sm:$0xf]
        %v251 = vld [vmem:[%s210 + $0x4] sm:$0xf]
        %v252 = vld [vmem:[%s210 + $0x8] sm:$0xf]
        %v253 = vld [vmem:[%s210 + $0xc] sm:$0xf]
        %v254 = vld [vmem:[%s219] sm:$0xf]
        %v255 = vld [vmem:[%s219 + $0x4] sm:$0xf]
        %v256 = vld [vmem:[%s219 + $0x8] sm:$0xf]
        %v257 = vld [vmem:[%s219 + $0xc] sm:$0xf]
        %v258 = vld [vmem:[%s219 + $0x10] sm:$0xf]
        %v259 = vld [vmem:[%s219 + $0x14] sm:$0xf]
        %v260 = vld [vmem:[%s219 + $0x18] sm:$0xf]
        %v261 = vld [vmem:[%s219 + $0x1c] sm:$0xf]
        %v262 = vld [vmem:[%s219 + $0x20] sm:$0xf]
        %v263 = vld [vmem:[%s219 + $0x24] sm:$0xf]
        %v264 = vld [vmem:[%s219 + $0x28] sm:$0xf]
        %v265 = vld [vmem:[%s219 + $0x2c] sm:$0xf]
        %v266 = vld [vmem:[%s219 + $0x30] sm:$0xf]
        %v267 = vld [vmem:[%s219 + $0x34] sm:$0xf]
        %v268 = vld [vmem:[%s219 + $0x38] sm:$0xf]
        %v269 = vld [vmem:[%s219 + $0x3c] sm:$0xf]
        %v270 = vld [vmem:[%s2] sm:$0x1]
        %v272 = vlaneseq
        %v273 = vshrl.u32 %v272, 7
        %v274 = vsub.s32 0, %v273
        %v275 = vrot.slane %v270, %v274
        %v281 = vunpack.c.l.b16 %v250
        %v282 = vunpack.c.l.b16 %v251
        %v283 = vunpack.c.l.b16 %v252
        %v284 = vunpack.c.l.b16 %v253
        %v285 = vpack.c.b16 %v282, %v281
        %v286 = vpack.c.b16 %v284, %v283
        %v305 = vunpack.c.l.b16 %v254
        %v306 = vunpack.c.l.b16 %v255
        %v307 = vunpack.c.l.b16 %v256
        %v308 = vunpack.c.l.b16 %v257
        %v309 = vunpack.c.l.b16 %v258
        %v310 = vunpack.c.l.b16 %v259
        %v311 = vunpack.c.l.b16 %v260
        %v312 = vunpack.c.l.b16 %v261
        %v313 = vunpack.c.l.b16 %v262
        %v314 = vunpack.c.l.b16 %v263
        %v315 = vunpack.c.l.b16 %v264
        %v316 = vunpack.c.l.b16 %v265
        %v317 = vunpack.c.l.b16 %v266
        %v318 = vunpack.c.l.b16 %v267
        %v319 = vunpack.c.l.b16 %v268
        %v320 = vunpack.c.l.b16 %v269
        %v321 = vpack.c.b16 %v306, %v305
        %v322 = vpack.c.b16 %v308, %v307
        %v323 = vpack.c.b16 %v310, %v309
        %v324 = vpack.c.b16 %v312, %v311
        %v325 = vpack.c.b16 %v314, %v313
        %v326 = vpack.c.b16 %v316, %v315
        %v327 = vpack.c.b16 %v318, %v317
        %v328 = vpack.c.b16 %v320, %v319
        %337 = vmatprep.subr.bf16.mxu0 0
        %338 = vmatpush1.bf16.msra.mxu0 %v328
        %339 = vmatprep.subr.bf16.mxu0 0
        %340 = vmatpush1.bf16.msra.mxu0 %v327
        %341 = vmatprep.subr.bf16.mxu0 0
        %342 = vmatpush1.bf16.msra.mxu0 %v326
        %343 = vmatprep.subr.bf16.mxu0 0
        %344 = vmatpush1.bf16.msra.mxu0 %v325
        %345 = vmatprep.subr.bf16.mxu0 0
        %346 = vmatpush1.bf16.msra.mxu0 %v324
        %347 = vmatprep.subr.bf16.mxu0 0
        %348 = vmatpush1.bf16.msra.mxu0 %v323
        %349 = vmatprep.subr.bf16.mxu0 0
        %350 = vmatpush1.bf16.msra.mxu0 %v322
        %351 = vmatprep.subr.bf16.mxu0 0
        %352 = vmatpush1.bf16.msra.mxu0 %v321
        %353 = vmatprep.subr.bf16.mxu0 0
        %354 = vmatpush2.bf16.msra.mxu0 0
        %355 = vmatprep.subr.bf16.mxu0 0
        %356 = vmatpush2.bf16.msra.mxu0 0
        %357 = vmatprep.subr.bf16.mxu0 0
        %358 = vmatpush2.bf16.msra.mxu0 0
        %359 = vmatprep.subr.bf16.mxu0 0
        %360 = vmatpush2.bf16.msra.mxu0 0
        %361 = vmatprep.subr.bf16.mxu0 0
        %362 = vmatpush2.bf16.msra.mxu0 0
        %363 = vmatprep.subr.bf16.mxu0 0
        %364 = vmatpush2.bf16.msra.mxu0 0
        %365 = vmatprep.subr.bf16.mxu0 0
        %366 = vmatpush2.bf16.msra.mxu0 0
        %367 = vmatprep.subr.bf16.mxu0 0
        %368 = vmatpush2.bf16.msra.mxu0 0
        %369 = vmatprep.mubr.bf16.mxu0 0
        %370 = vmatmul.mubr.bf16.gmra.mxu0 %v285
        %v371 = vpop.f32.mrf.mxu0
        %v372 = vadd.f32 %v275, %v371
        %v373 = vpop.f32.mrf.mxu0
        %v374 = vpop.f32.mrf.mxu0
        %v375 = vadd.f32 %v275, %v374
        %v376 = vpop.f32.mrf.mxu0
        %377 = vmatprep.mubr.bf16.mxu0 0
        %378 = vmatmul.mubr.bf16.gmra.mxu0 %v286
        %v379 = vpop.f32.mrf.mxu0
        %v380 = vadd.f32 %v275, %v379
        %v381 = vpop.f32.mrf.mxu0
        %v382 = vpop.f32.mrf.mxu0
        %v383 = vadd.f32 %v275, %v382
        %v384 = vpop.f32.mrf.mxu0
        %385 = vdwg.mxu0
        %386 = vst [vmem:[%s246] sm:$0xff] %v372
        %387 = vst [vmem:[%s246 + $0x8] sm:$0xff] %v375
        %388 = vst [vmem:[%s246 + $0x10] sm:$0xff] %v380
        %389 = vst [vmem:[%s246 + $0x18] sm:$0xff] %v383
        %s390 = sand.u32 %s120, 1
        %s391 = scalar_lea.sflag [#allocation4], %s390
        %s392 = sand.u32 %s120, 1
        %s393 = smul.addr %s392, 32
        %s394 = scalar_lea.vmem [#allocation7], %s393
        // Predicated region
        $region41: #{tpu_custom_call.1} parent=31 // pred_check
          %p395 = pneg %p130
        $region42: #{tpu_custom_call.1} parent=31 // pred_check_branch
          %397 = sbr.rel (%p395) target = $region44
        $region43: #{tpu_custom_call.1} parent=31 // pred_region
          %s398 = smul.u32 4, %s28
          %s400 = ssub.s32 512, 512
          %401 = vsyncadd %s391, %s400
          %s402 = smul.addr %s27, 4
          %s403 = sadd.s32 %s398, %s402
          %s404 = smul.addr %s403, 128
          %s405 = scalar_lea.hbm %s3, %s404
          %s406 = sshll.u32 %s394, 4
          %s407 = int_to_ptr.vmem [resolvable:$true] %s406
          %412 = dma.vmem_to_hbm [thread:$0]  %s407, 512, %s405, %s391, 128, 128, 8
        $region44: #{tpu_custom_call.1} parent=31 // pred_fallthru
          _
      $region32: #{tpu_custom_call.1} parent=5 // pred_fallthru
        _
      %p413 = scmp.le.s32.totalorder 2, %s18
      // Predicated region
      $region45: #{tpu_custom_call.1} parent=5 // pred_check
        %p414 = pneg %p413
      $region46: #{tpu_custom_call.1} parent=5 // pred_check_branch
        %416 = sbr.rel (%p414) target = $region48
      $region47: #{tpu_custom_call.1} parent=5 // pred_region
        %s417 = ssub.s32 %s18, 2
        // Predicated region
        $region49: #{tpu_custom_call.1} parent=47 // pred_check
          %p418 = pneg %p136
        $region50: #{tpu_custom_call.1} parent=47 // pred_check_branch
          %420 = sbr.rel (%p418) target = $region52
        $region51: #{tpu_custom_call.1} parent=47 // pred_region
          %s421 = sand.u32 %s121, 1
          %s422 = scalar_lea.sflag [#allocation4], %s421
          %s423 = sand.u32 %s121, 1
          %s424 = smul.addr %s423, 32
          %s425 = scalar_lea.vmem [#allocation7], %s424
          %426 = dma.done %s422, 512
        $region52: #{tpu_custom_call.1} parent=47 // pred_fallthru
          _
      $region48: #{tpu_custom_call.1} parent=5 // pred_fallthru
        _
    $region6: #{tpu_custom_call.1} parent=1 // loop_footer
      %s22 = sadd.s32 1, %s18
    $region7: #{tpu_custom_call.1} parent=1 // loop_footer_branch
      %17 = sbr.rel target = $region3
    $region8: #{tpu_custom_call.1} parent=1 // loop_exit
      _
    %427 = vsyncpa [#allocation3], 1
    %s428 = scalar_lea.sflag [#allocation3], 1
    %429 = vsyncpa %s428, 1
    %430 = vsyncpa [#allocation6], 1
    %s431 = scalar_lea.sflag [#allocation6], 1
    %432 = vsyncpa %s431, 1
    %433 = vsyncpa [#allocation4], 1
    %s434 = scalar_lea.sflag [#allocation4], 1
    %435 = vsyncpa %s434, 1

</llo_original>
